<compile_context>
chip_gen: v7x
topology: tpu7x:2x2x1
jax: 0.10.0
libtpu: 0.0.40
codegen_flags: <defaults>
</compile_context>

<pallas_src>
import numpy as np
import jax
import jax.numpy as jnp
from jax import lax
from jax.experimental import pallas as pl
from jax.experimental.pallas import tpu as pltpu


def _masked_shift_mse_kernel(shifts_ref, d_ori_ref, d_shift_ref, mask_ref,
                             out_ref, dbuf_ref):
    b = pl.program_id(0)                    # sample index within the "ori" half
    C, H, W = d_ori_ref.shape

    sh = shifts_ref[b, 0]
    sw = shifts_ref[b, 1]

    # Cyclic-equivalent non-negative shift amounts (wrapped pixels are masked
    # out below, so using the modulo is exact).
    sh_mod = sh % H                          # floor-mod -> in [0, H)
    sw_mod = sw % W                          # floor-mod -> in [0, W)
    row_start = H - sh_mod                   # in [1, H]; window fits the 2H buffer

    # Validity of the overlap region: 0 <= p - sh < H and 0 <= q - sw < W.
    rr = lax.broadcasted_iota(jnp.int32, (H, W), 0)
    cc = lax.broadcasted_iota(jnp.int32, (H, W), 1)
    pr = rr - sh
    qc = cc - sw
    valid = ((pr >= 0) & (pr < H) & (qc >= 0) & (qc < W)).astype(jnp.float32)

    part = jnp.zeros((H, W), jnp.float32)    # elementwise accum of mm*diff^2
    cnt = jnp.zeros((H, W), jnp.float32)     # elementwise accum of mm
    for ci in range(C):                      # C is small & static (depth: C=1)
        d_o = d_ori_ref[ci].astype(jnp.float32)
        d_s = d_shift_ref[ci].astype(jnp.float32)
        m = mask_ref[ci].astype(jnp.float32)

        # Row (sublane) shift via doubled buffer + dynamic slice:
        #   rolled_h[p, :] = d_s[(p - sh) mod H, :]
        dbuf_ref[0:H, :] = d_s
        dbuf_ref[H:2 * H, :] = d_s
        rolled_h = dbuf_ref[pl.ds(row_start, H), :]

        # Column (lane) shift on the XLU:
        #   aligned[p, q] = d_s[(p - sh) mod H, (q - sw) mod W]
        aligned = pltpu.roll(rolled_h, sw_mod, axis=1)

        mm = m * valid
        diff = d_o - aligned
        part = part + mm * diff * diff
        cnt = cnt + mm

    s = jnp.sum(part)
    n = jnp.sum(cnt)

    # Lane-dense (8,128) per-sample partial tile: row 0 = sum, row 1 = count.
    rows = lax.broadcasted_iota(jnp.int32, (8, 128), 0)
    out_ref[...] = jnp.where(rows == 0, s, jnp.where(rows == 1, n, 0.0))


def _consistency_loss_pred(depth_preds, shifts, mask):
    bs, c, H, W = depth_preds.shape
    bh = bs // 2
    shifts_i32 = shifts.astype(jnp.int32)
    # int8 keeps the mask at 1 byte/element in HBM (no 4x f32 blow-up);
    # it is cast to f32 inside the kernel.  Depth is read in its native dtype.
    mask_i8 = mask.astype(jnp.int8)

    grid_spec = pltpu.PrefetchScalarGridSpec(
        num_scalar_prefetch=1,
        grid=(bh,),
        in_specs=[
            # "ori" half of depth_preds (same HBM array, block b)
            pl.BlockSpec((None, c, H, W), lambda b, s: (b, 0, 0, 0)),
            # "shift" half of depth_preds (same HBM array, block b + bh)
            pl.BlockSpec((None, c, H, W), lambda b, s: (b + bh, 0, 0, 0)),
            # "ori" half of the mask
            pl.BlockSpec((None, c, H, W), lambda b, s: (b, 0, 0, 0)),
        ],
        out_specs=pl.BlockSpec((None, 8, 128), lambda b, s: (b, 0, 0)),
        scratch_shapes=[pltpu.VMEM((2 * H, W), jnp.float32)],
    )

    partials = pl.pallas_call(
        _masked_shift_mse_kernel,
        out_shape=jax.ShapeDtypeStruct((bh, 8, 128), jnp.float32),
        grid_spec=grid_spec,
        compiler_params=pltpu.CompilerParams(
            dimension_semantics=("parallel",)),
    )(shifts_i32, depth_preds, depth_preds, mask_i8)

    s = jnp.sum(partials[:, 0, 0])
    n = jnp.sum(partials[:, 1, 0])
    # Matches PyTorch: empty masked selection -> loss 0, else mean of sq. diff.
    return jnp.where(n > 0, s / jnp.maximum(n, 1.0), jnp.float32(0.0))


class ConsistencyLoss:
    """JAX/Pallas port of zoedepth ConsistencyLoss (target='pred')."""

    def __init__(self, target, focus_flatten=False, wp=1):
        self.name = "Consistency"
        self.target = target
        self.mode = "no-resize"
        self.focus_flatten = focus_flatten
        self.wp = wp

    def __call__(self, depth_preds, shifts, mask, temp_features=None, pred_f=None):
        if self.focus_flatten:
            # TODO(synk): kornia spatial_gradient / gaussian_blur2d mask refinement.
            raise NotImplementedError("focus_flatten path not implemented")
        if self.target == "pred":
            return _consistency_loss_pred(depth_preds, shifts, mask)
        # TODO(synk): 'feat' / 'mix' multi-scale branches (F.interpolate of masks).
        raise NotImplementedError(f"target={self.target!r} not implemented")


def _reference_loss_pred(depth, mask, shifts):
    """NumPy re-implementation of the PyTorch target='pred' branch."""
    depth = np.asarray(depth, np.float32)
    mask = np.asarray(mask, bool)
    bs = depth.shape[0]
    bh = bs // 2
    a_list, b_list = [], []
    for i in range(bh):
        d_o, d_s, m_o = depth[i], depth[bh + i], mask[i]
        sh, sw = int(shifts[i][0]), int(shifts[i][1])
        if sh >= 0 and sw >= 0:
            c1, c2, mc = d_o[:, sh:, sw:], d_s[:, :-sh, :-sw], m_o[:, sh:, sw:]
        elif sh >= 0 and sw <= 0:
            c1, c2, mc = d_o[:, sh:, :sw], d_s[:, :-sh, -sw:], m_o[:, sh:, :sw]
        elif sh <= 0 and sw <= 0:
            c1, c2, mc = d_o[:, :sh, :sw], d_s[:, -sh:, -sw:], m_o[:, :sh, :sw]
        else:
            c1, c2, mc = d_o[:, :sh, sw:], d_s[:, -sh:, :-sw], m_o[:, :sh, sw:]
        a_list.append(c1[mc].ravel())
        b_list.append(c2[mc].ravel())
    a = np.concatenate(a_list)
    b = np.concatenate(b_list)
    if a.size == 0:
        return 0.0
    return float(np.mean((a - b) ** 2))


if __name__ == "__main__":
    key = jax.random.PRNGKey(0)
    k1, k2 = jax.random.split(key)

    bs, c, H, W = 4, 2, 16, 128
    depth_preds = jax.random.normal(k1, (bs, c, H, W), dtype=jnp.float32)
    mask = jax.random.uniform(k2, (bs, c, H, W)) > 0.3
    shifts = jnp.array([[2, -5], [-3, 7]], dtype=jnp.int32)  # (bs//2, 2)

    loss_mod = ConsistencyLoss(target="pred")
    loss = loss_mod(depth_preds, shifts, mask)
    loss = jax.block_until_ready(loss)

    ref = _reference_loss_pred(np.asarray(depth_preds), np.asarray(mask),
                               np.asarray(shifts))
    np.testing.assert_allclose(float(loss), ref, rtol=1e-5, atol=1e-6)
    print("KERNEL_OK")
</pallas_src>

<mosaic_0001>
module attributes {stable_mosaic.version = 11 : i64} {
  func.func @_masked_shift_mse_kernel(%arg0: i32, %arg1: memref<2x2xi32, #tpu.memory_space<smem>>, %arg2: memref<1x2x16x128xf32, #tpu.memory_space<vmem>>, %arg3: memref<1x2x16x128xf32, #tpu.memory_space<vmem>>, %arg4: memref<1x2x16x128xi8, #tpu.memory_space<vmem>>, %arg5: memref<1x8x128xf32, #tpu.memory_space<vmem>>, %arg6: memref<32x128xf32, #tpu.memory_space<vmem>>) attributes {dimension_semantics = [#tpu.dimension_semantics<parallel>], iteration_bounds = array<i64: 2>, scalar_prefetch = 1 : i64, scratch_operands = 1 : i64, tpu.core_type = #tpu.core_type<tc>, window_params = [{transform_indices = @transform_0, window_bounds = array<i64: 1, 2, 16, 128>}, {transform_indices = @transform_1, window_bounds = array<i64: 1, 2, 16, 128>}, {transform_indices = @transform_2, window_bounds = array<i64: 1, 2, 16, 128>}, {transform_indices = @transform_3, window_bounds = array<i64: 1, 8, 128>}]} {
    %0 = arith.index_cast %arg0 : i32 to index
    %c0 = arith.constant 0 : index
    %1 = memref.load %arg1[%0, %c0] : memref<2x2xi32, #tpu.memory_space<smem>>
    %2 = arith.index_cast %arg0 : i32 to index
    %c1 = arith.constant 1 : index
    %3 = memref.load %arg1[%2, %c1] : memref<2x2xi32, #tpu.memory_space<smem>>
    %c16_i32 = arith.constant 16 : i32
    %c0_i32 = arith.constant 0 : i32
    %4 = arith.cmpi eq, %c16_i32, %c0_i32 : i32
    %c1_i32 = arith.constant 1 : i32
    %5 = arith.select %4, %c1_i32, %c16_i32 : i32
    %6 = arith.remsi %1, %5 : i32
    %c0_i32_0 = arith.constant 0 : i32
    %7 = arith.cmpi ne, %6, %c0_i32_0 : i32
    %c0_i32_1 = arith.constant 0 : i32
    %8 = arith.cmpi slt, %6, %c0_i32_1 : i32
    %c0_i32_2 = arith.constant 0 : i32
    %9 = arith.cmpi slt, %5, %c0_i32_2 : i32
    %10 = arith.xori %8, %9 : i1
    %11 = arith.andi %10, %7 : i1
    %12 = arith.addi %6, %5 : i32
    %13 = arith.select %11, %12, %6 : i32
    %c128_i32 = arith.constant 128 : i32
    %c0_i32_3 = arith.constant 0 : i32
    %14 = arith.cmpi eq, %c128_i32, %c0_i32_3 : i32
    %c1_i32_4 = arith.constant 1 : i32
    %15 = arith.select %14, %c1_i32_4, %c128_i32 : i32
    %16 = arith.remsi %3, %15 : i32
    %c0_i32_5 = arith.constant 0 : i32
    %17 = arith.cmpi ne, %16, %c0_i32_5 : i32
    %c0_i32_6 = arith.constant 0 : i32
    %18 = arith.cmpi slt, %16, %c0_i32_6 : i32
    %c0_i32_7 = arith.constant 0 : i32
    %19 = arith.cmpi slt, %15, %c0_i32_7 : i32
    %20 = arith.xori %18, %19 : i1
    %21 = arith.andi %20, %17 : i1
    %22 = arith.addi %16, %15 : i32
    %23 = arith.select %21, %22, %16 : i32
    %c16_i32_8 = arith.constant 16 : i32
    %24 = arith.subi %c16_i32_8, %13 : i32
    %25 = tpu.iota {dimensions = array<i32: 0>} : vector<16x128xi32>
    %26 = tpu.iota {dimensions = array<i32: 1>} : vector<16x128xi32>
    %27 = vector.broadcast %1 : i32 to vector<16x128xi32>
    %28 = arith.subi %25, %27 : vector<16x128xi32>
    %29 = vector.broadcast %3 : i32 to vector<16x128xi32>
    %30 = arith.subi %26, %29 : vector<16x128xi32>
    %c0_i32_9 = arith.constant 0 : i32
    %31 = vector.broadcast %c0_i32_9 : i32 to vector<16x128xi32>
    %32 = arith.cmpi sge, %28, %31 : vector<16x128xi32>
    %c16_i32_10 = arith.constant 16 : i32
    %33 = vector.broadcast %c16_i32_10 : i32 to vector<16x128xi32>
    %34 = arith.cmpi slt, %28, %33 : vector<16x128xi32>
    %35 = arith.andi %32, %34 : vector<16x128xi1>
    %c0_i32_11 = arith.constant 0 : i32
    %36 = vector.broadcast %c0_i32_11 : i32 to vector<16x128xi32>
    %37 = arith.cmpi sge, %30, %36 : vector<16x128xi32>
    %38 = arith.andi %35, %37 : vector<16x128xi1>
    %c128_i32_12 = arith.constant 128 : i32
    %39 = vector.broadcast %c128_i32_12 : i32 to vector<16x128xi32>
    %40 = arith.cmpi slt, %30, %39 : vector<16x128xi32>
    %41 = arith.andi %38, %40 : vector<16x128xi1>
    %42 = arith.extui %41 : vector<16x128xi1> to vector<16x128xi32>
    %43 = arith.sitofp %42 : vector<16x128xi32> to vector<16x128xf32>
    %cst = arith.constant 0.000000e+00 : f32
    %44 = vector.broadcast %cst : f32 to vector<16x128xf32>
    %cst_13 = arith.constant 0.000000e+00 : f32
    %45 = vector.broadcast %cst_13 : f32 to vector<16x128xf32>
    %c0_14 = arith.constant 0 : index
    %c0_15 = arith.constant 0 : index
    %c0_16 = arith.constant 0 : index
    %c0_17 = arith.constant 0 : index
    %46 = vector.load %arg2[%c0_14, %c0_15, %c0_16, %c0_17] : memref<1x2x16x128xf32, #tpu.memory_space<vmem>>, vector<1x1x16x128xf32>
    %47 = vector.shape_cast %46 : vector<1x1x16x128xf32> to vector<16x128xf32>
    %c0_18 = arith.constant 0 : index
    %c0_19 = arith.constant 0 : index
    %c0_20 = arith.constant 0 : index
    %c0_21 = arith.constant 0 : index
    %48 = vector.load %arg3[%c0_18, %c0_19, %c0_20, %c0_21] : memref<1x2x16x128xf32, #tpu.memory_space<vmem>>, vector<1x1x16x128xf32>
    %49 = vector.shape_cast %48 : vector<1x1x16x128xf32> to vector<16x128xf32>
    %c0_22 = arith.constant 0 : index
    %c0_23 = arith.constant 0 : index
    %c0_24 = arith.constant 0 : index
    %c0_25 = arith.constant 0 : index
    %50 = vector.load %arg4[%c0_22, %c0_23, %c0_24, %c0_25] : memref<1x2x16x128xi8, #tpu.memory_space<vmem>>, vector<1x1x16x128xi8>
    %51 = vector.shape_cast %50 : vector<1x1x16x128xi8> to vector<16x128xi8>
    %52 = arith.sitofp %51 : vector<16x128xi8> to vector<16x128xf32>
    %c0_26 = arith.constant 0 : index
    %c0_27 = arith.constant 0 : index
    %53 = vector.load %arg6[%c0_26, %c0_27] : memref<32x128xf32, #tpu.memory_space<vmem>>, vector<16x128xf32>
    tpu.vector_store %arg6[%c0_26, %c0_27], %49 {strides = array<i32>} : memref<32x128xf32, #tpu.memory_space<vmem>>, vector<16x128xf32>,
    %c16 = arith.constant 16 : index
    %c0_28 = arith.constant 0 : index
    %54 = vector.load %arg6[%c16, %c0_28] : memref<32x128xf32, #tpu.memory_space<vmem>>, vector<16x128xf32>
    tpu.vector_store %arg6[%c16, %c0_28], %49 {strides = array<i32>} : memref<32x128xf32, #tpu.memory_space<vmem>>, vector<16x128xf32>,
    %55 = arith.index_cast %24 : i32 to index
    %c0_29 = arith.constant 0 : index
    %56 = vector.load %arg6[%55, %c0_29] : memref<32x128xf32, #tpu.memory_space<vmem>>, vector<16x128xf32>
    %57 = tpu.dynamic_rotate %56 by %23 dim 1 : vector<16x128xf32>, i32 -> vector<16x128xf32>
    %58 = arith.mulf %52, %43 : vector<16x128xf32>
    %59 = arith.subf %47, %57 : vector<16x128xf32>
    %60 = arith.mulf %58, %59 : vector<16x128xf32>
    %61 = arith.mulf %60, %59 : vector<16x128xf32>
    %62 = arith.addf %44, %61 : vector<16x128xf32>
    %63 = arith.addf %45, %58 : vector<16x128xf32>
    %c0_30 = arith.constant 0 : index
    %c1_31 = arith.constant 1 : index
    %c0_32 = arith.constant 0 : index
    %c0_33 = arith.constant 0 : index
    %64 = vector.load %arg2[%c0_30, %c1_31, %c0_32, %c0_33] : memref<1x2x16x128xf32, #tpu.memory_space<vmem>>, vector<1x1x16x128xf32>
    %65 = vector.shape_cast %64 : vector<1x1x16x128xf32> to vector<16x128xf32>
    %c0_34 = arith.constant 0 : index
    %c1_35 = arith.constant 1 : index
    %c0_36 = arith.constant 0 : index
    %c0_37 = arith.constant 0 : index
    %66 = vector.load %arg3[%c0_34, %c1_35, %c0_36, %c0_37] : memref<1x2x16x128xf32, #tpu.memory_space<vmem>>, vector<1x1x16x128xf32>
    %67 = vector.shape_cast %66 : vector<1x1x16x128xf32> to vector<16x128xf32>
    %c0_38 = arith.constant 0 : index
    %c1_39 = arith.constant 1 : index
    %c0_40 = arith.constant 0 : index
    %c0_41 = arith.constant 0 : index
    %68 = vector.load %arg4[%c0_38, %c1_39, %c0_40, %c0_41] : memref<1x2x16x128xi8, #tpu.memory_space<vmem>>, vector<1x1x16x128xi8>
    %69 = vector.shape_cast %68 : vector<1x1x16x128xi8> to vector<16x128xi8>
    %70 = arith.sitofp %69 : vector<16x128xi8> to vector<16x128xf32>
    %c0_42 = arith.constant 0 : index
    %c0_43 = arith.constant 0 : index
    %71 = vector.load %arg6[%c0_42, %c0_43] : memref<32x128xf32, #tpu.memory_space<vmem>>, vector<16x128xf32>
    tpu.vector_store %arg6[%c0_42, %c0_43], %67 {strides = array<i32>} : memref<32x128xf32, #tpu.memory_space<vmem>>, vector<16x128xf32>,
    %c16_44 = arith.constant 16 : index
    %c0_45 = arith.constant 0 : index
    %72 = vector.load %arg6[%c16_44, %c0_45] : memref<32x128xf32, #tpu.memory_space<vmem>>, vector<16x128xf32>
    tpu.vector_store %arg6[%c16_44, %c0_45], %67 {strides = array<i32>} : memref<32x128xf32, #tpu.memory_space<vmem>>, vector<16x128xf32>,
    %73 = arith.index_cast %24 : i32 to index
    %c0_46 = arith.constant 0 : index
    %74 = vector.load %arg6[%73, %c0_46] : memref<32x128xf32, #tpu.memory_space<vmem>>, vector<16x128xf32>
    %75 = tpu.dynamic_rotate %74 by %23 dim 1 : vector<16x128xf32>, i32 -> vector<16x128xf32>
    %76 = arith.mulf %70, %43 : vector<16x128xf32>
    %77 = arith.subf %65, %75 : vector<16x128xf32>
    %78 = arith.mulf %76, %77 : vector<16x128xf32>
    %79 = arith.mulf %78, %77 : vector<16x128xf32>
    %80 = arith.addf %62, %79 : vector<16x128xf32>
    %81 = arith.addf %63, %76 : vector<16x128xf32>
    %82 = vector.shape_cast %80 : vector<16x128xf32> to vector<1x16x128xf32>
    %cst_47 = arith.constant dense<0.000000e+00> : vector<1xf32>
    %83 = vector.multi_reduction <add>, %82, %cst_47 [1, 2] : vector<1x16x128xf32> to vector<1xf32>
    %84 = vector.shape_cast %83 : vector<1xf32> to vector<1x1x1xf32>
    %85 = vector.extract %84[0, 0, 0] : f32 from vector<1x1x1xf32>
    %86 = vector.shape_cast %81 : vector<16x128xf32> to vector<1x16x128xf32>
    %cst_48 = arith.constant dense<0.000000e+00> : vector<1xf32>
    %87 = vector.multi_reduction <add>, %86, %cst_48 [1, 2] : vector<1x16x128xf32> to vector<1xf32>
    %88 = vector.shape_cast %87 : vector<1xf32> to vector<1x1x1xf32>
    %89 = vector.extract %88[0, 0, 0] : f32 from vector<1x1x1xf32>
    %90 = tpu.iota {dimensions = array<i32: 0>} : vector<8x128xi32>
    %c0_i32_49 = arith.constant 0 : i32
    %91 = vector.broadcast %c0_i32_49 : i32 to vector<8x128xi32>
    %92 = arith.cmpi eq, %90, %91 : vector<8x128xi32>
    %c1_i32_50 = arith.constant 1 : i32
    %93 = vector.broadcast %c1_i32_50 : i32 to vector<8x128xi32>
    %94 = arith.cmpi eq, %90, %93 : vector<8x128xi32>
    %cst_51 = arith.constant 0.000000e+00 : f32
    %95 = vector.broadcast %89 : f32 to vector<8x128xf32>
    %96 = vector.broadcast %cst_51 : f32 to vector<8x128xf32>
    %97 = arith.select %94, %95, %96 : vector<8x128xi1>, vector<8x128xf32>
    %98 = vector.broadcast %85 : f32 to vector<8x128xf32>
    %99 = arith.select %92, %98, %97 : vector<8x128xi1>, vector<8x128xf32>
    %c0_52 = arith.constant 0 : index
    %c0_53 = arith.constant 0 : index
    %c0_54 = arith.constant 0 : index
    %100 = vector.load %arg5[%c0_52, %c0_53, %c0_54] : memref<1x8x128xf32, #tpu.memory_space<vmem>>, vector<1x8x128xf32>
    %101 = vector.shape_cast %100 : vector<1x8x128xf32> to vector<8x128xf32>
    %102 = vector.shape_cast %99 : vector<8x128xf32> to vector<1x8x128xf32>
    tpu.vector_store %arg5[%c0_52, %c0_53, %c0_54], %102 {strides = array<i32>} : memref<1x8x128xf32, #tpu.memory_space<vmem>>, vector<1x8x128xf32>,
    return
  }
  func.func @transform_0(%arg0: i32, %arg1: memref<2x2xi32, #tpu.memory_space<smem>>) -> (i32, i32, i32, i32) {
    %c0_i32 = arith.constant 0 : i32
    %c0_i32_0 = arith.constant 0 : i32
    %c0_i32_1 = arith.constant 0 : i32
    %c0_i32_2 = arith.constant 0 : i32
    return %arg0, %c0_i32, %c0_i32_0, %c0_i32_1 : i32, i32, i32, i32
  }
  func.func @transform_1(%arg0: i32, %arg1: memref<2x2xi32, #tpu.memory_space<smem>>) -> (i32, i32, i32, i32) {
    %c2_i32 = arith.constant 2 : i32
    %0 = arith.addi %arg0, %c2_i32 : i32
    %c0_i32 = arith.constant 0 : i32
    %c0_i32_0 = arith.constant 0 : i32
    %c0_i32_1 = arith.constant 0 : i32
    %c0_i32_2 = arith.constant 0 : i32
    return %0, %c0_i32, %c0_i32_0, %c0_i32_1 : i32, i32, i32, i32
  }
  func.func @transform_2(%arg0: i32, %arg1: memref<2x2xi32, #tpu.memory_space<smem>>) -> (i32, i32, i32, i32) {
    %c0_i32 = arith.constant 0 : i32
    %c0_i32_0 = arith.constant 0 : i32
    %c0_i32_1 = arith.constant 0 : i32
    %c0_i32_2 = arith.constant 0 : i32
    return %arg0, %c0_i32, %c0_i32_0, %c0_i32_1 : i32, i32, i32, i32
  }
  func.func @transform_3(%arg0: i32, %arg1: memref<2x2xi32, #tpu.memory_space<smem>>) -> (i32, i32, i32) {
    %c0_i32 = arith.constant 0 : i32
    %c0_i32_0 = arith.constant 0 : i32
    %c0_i32_1 = arith.constant 0 : i32
    return %arg0, %c0_i32, %c0_i32_0 : i32, i32, i32
  }
}

</mosaic_0001>

<llo_original>
// kernel: tpu_custom_call.1
$region0: #{tpu_custom_call.1}
  #allocation0 [shape = 'u32[]', space=smem, size = 0x4, offset = 0x4, fixed_abs, tag = 'smem constant byte address 0x4 - core index']
  #allocation1 [shape = 'u32[144,128]{1,0:T(1,128)}', space=vmem, size = 0x12000, scoped, tag = 'internal scratch']
  #allocation2 [shape = 'f32[32,128]{1,0:T(8,128)}', space=vmem, size = 0x4000, scoped, tag = 'scratch operand']
  #allocation3 [shape = 's32[1]{0}', space=sflag, size = 0x4, scoped, tag = 'scoped memory for tpu_custom_call.1']
  #allocation4 [shape = 'u8[1024]{0}', space=smem, size = 0x400, scoped, tag = 'prefetched SMEM operand 0']
  %s0 = inlined_call_operand.hbm [shape: s32[2,2], index: 0, kind: input, shape index: {}]
  %s1 = inlined_call_operand.hbm [shape: f32[4,2,16,128], index: 1, kind: input, shape index: {}]
  %s2 = inlined_call_operand.hbm [shape: f32[4,2,16,128], index: 2, kind: input, shape index: {}]
  %s3 = inlined_call_operand.hbm [shape: s8[4,2,16,128], index: 3, kind: input, shape index: {}]
  %s4 = inlined_call_operand.hbm [shape: f32[2,8,128], index: 4, kind: output, shape index: {}]
  %s5 = sld [smem:[#allocation0]]
  $region57: #{tpu_custom_call.1} parent=0
    _
  %s7 = ssub.s32 1, %s5
  %s8 = scalar_select 0, %s7, %s5
  %10 = dma.hbm_to_smem %s0, 32, [#allocation4], [#allocation3]
  %11 = dma.done [#allocation3], 32
  %12 = sfence
  $region1: #{tpu_custom_call.1} parent=0
    #allocation5 [shape = 'u8[32768]{0}', space=vmem, size = 0x8000, scoped, tag = 'input window, operand 1']
    #allocation6 [shape = 's32[2]{0}', space=sflag, size = 0x8, scoped, tag = 'scoped memory for tpu_custom_call.1']
    #allocation7 [shape = 's32[2]{0}', space=sflag, size = 0x8, scoped, tag = 'scoped memory for tpu_custom_call.1']
    #allocation8 [shape = 'u8[32768]{0}', space=vmem, size = 0x8000, scoped, tag = 'input window, operand 2']
    #allocation9 [shape = 's32[2]{0}', space=sflag, size = 0x8, scoped, tag = 'scoped memory for tpu_custom_call.1']
    #allocation10 [shape = 'u8[8192]{0}', space=vmem, size = 0x2000, scoped, tag = 'input window, operand 3']
    #allocation11 [shape = 'u8[8192]{0}', space=vmem, size = 0x2000, scoped, tag = 'output window, operand 0']
    %13 = vsyncpa [#allocation6], 0
    %s14 = scalar_lea.sflag [#allocation6], 1
    %15 = vsyncpa %s14, 0
    %16 = vsyncpa [#allocation9], 0
    %s17 = scalar_lea.sflag [#allocation9], 1
    %18 = vsyncpa %s17, 0
    %19 = vsyncpa [#allocation7], 0
    %s20 = scalar_lea.sflag [#allocation7], 1
    %21 = vsyncpa %s20, 0
    loop: start=0, step=1, limit=4
    $region2: #{tpu_custom_call.1} parent=1 // loop_pre_header
      _
    $region3: #{tpu_custom_call.1} parent=1 // loop_header
      %s23 = sphi 0, %s27
      %p24 = scmp.ge.s32.totalorder %s23, 4
      %s33 = sphi 0, %s35
      %s36 = sphi 0, %s33
      %s37 = sphi 0, %s36
      %s53 = sphi 0, %s37
      %s61 = sphi 0, %s63
      %s64 = sphi 0, %s61
      %s65 = sphi 0, %s64
      %s81 = sphi 0, %s65
      %s87 = sphi 0, %s89
      %s90 = sphi 0, %s87
      %s91 = sphi 0, %s90
      %s107 = sphi 0, %s91
      %s113 = sphi 0, %s115
      %s116 = sphi 0, %s113
      %s117 = sphi 0, %s116
      %s133 = sphi 0, %s117
    $region4: #{tpu_custom_call.1} parent=1 // loop_header_branch
      %26 = sbr.rel (%p24) target = $region8
    $region5: #{tpu_custom_call.1} parent=1 // loop_body
      %s28 = ssub.s32 %s23, 1
      %s29 = ssub.s32 %s23, 2
      %s30 = sadd.s32 %s23, 1
      %s31 = ssub.s32 %s23, %s30
      %p32 = scmp.eq.s32.totalorder %s31, 0
      %s34 = sadd.s32 %s33, 1
      %s35 = scalar_select %p32, %s33, %s34
      %p38 = pneg %p32
      %p39 = scmp.eq.s32.totalorder %s23, 1
      %p40 = por %p38, %p39
      %p41 = scmp.ne.s32.totalorder %s33, %s36
      %p42 = scmp.eq.s32.totalorder %s23, 0
      %p43 = por %p41, %p42
      %p44 = scmp.ne.s32.totalorder %s33, %s36
      %p45 = scmp.eq.s32.totalorder %s28, 1
      %p46 = por %p44, %p45
      %p47 = scmp.ne.s32.totalorder %s36, %s37
      %p48 = scmp.eq.s32.totalorder %s28, 0
      %p49 = por %p47, %p48
      %p50 = scmp.ne.s32.totalorder %s36, %s37
      %p51 = scmp.eq.s32.totalorder %s29, 1
      %p52 = por %p50, %p51
      %p54 = scmp.ne.s32.totalorder %s37, %s53
      %p55 = scmp.eq.s32.totalorder %s29, 0
      %p56 = por %p54, %p55
      %s57 = sadd.s32 %s23, 2
      %s58 = sadd.s32 %s30, 2
      %s59 = ssub.s32 %s57, %s58
      %p60 = scmp.eq.s32.totalorder %s59, 0
      %s62 = sadd.s32 %s61, 1
      %s63 = scalar_select %p60, %s61, %s62
      %p66 = pneg %p60
      %p67 = scmp.eq.s32.totalorder %s23, 1
      %p68 = por %p66, %p67
      %p69 = scmp.ne.s32.totalorder %s61, %s64
      %p70 = scmp.eq.s32.totalorder %s23, 0
      %p71 = por %p69, %p70
      %p72 = scmp.ne.s32.totalorder %s61, %s64
      %p73 = scmp.eq.s32.totalorder %s28, 1
      %p74 = por %p72, %p73
      %p75 = scmp.ne.s32.totalorder %s64, %s65
      %p76 = scmp.eq.s32.totalorder %s28, 0
      %p77 = por %p75, %p76
      %p78 = scmp.ne.s32.totalorder %s64, %s65
      %p79 = scmp.eq.s32.totalorder %s29, 1
      %p80 = por %p78, %p79
      %p82 = scmp.ne.s32.totalorder %s65, %s81
      %p83 = scmp.eq.s32.totalorder %s29, 0
      %p84 = por %p82, %p83
      %s85 = ssub.s32 %s23, %s30
      %p86 = scmp.eq.s32.totalorder %s85, 0
      %s88 = sadd.s32 %s87, 1
      %s89 = scalar_select %p86, %s87, %s88
      %p92 = pneg %p86
      %p93 = scmp.eq.s32.totalorder %s23, 1
      %p94 = por %p92, %p93
      %p95 = scmp.ne.s32.totalorder %s87, %s90
      %p96 = scmp.eq.s32.totalorder %s23, 0
      %p97 = por %p95, %p96
      %p98 = scmp.ne.s32.totalorder %s87, %s90
      %p99 = scmp.eq.s32.totalorder %s28, 1
      %p100 = por %p98, %p99
      %p101 = scmp.ne.s32.totalorder %s90, %s91
      %p102 = scmp.eq.s32.totalorder %s28, 0
      %p103 = por %p101, %p102
      %p104 = scmp.ne.s32.totalorder %s90, %s91
      %p105 = scmp.eq.s32.totalorder %s29, 1
      %p106 = por %p104, %p105
      %p108 = scmp.ne.s32.totalorder %s91, %s107
      %p109 = scmp.eq.s32.totalorder %s29, 0
      %p110 = por %p108, %p109
      %s111 = ssub.s32 %s23, %s30
      %p112 = scmp.eq.s32.totalorder %s111, 0
      %s114 = sadd.s32 %s113, 1
      %s115 = scalar_select %p112, %s113, %s114
      %p118 = pneg %p112
      %p119 = scmp.eq.s32.totalorder %s23, 1
      %p120 = por %p118, %p119
      %p121 = scmp.ne.s32.totalorder %s113, %s116
      %p122 = scmp.eq.s32.totalorder %s23, 0
      %p123 = por %p121, %p122
      %p124 = scmp.ne.s32.totalorder %s113, %s116
      %p125 = scmp.eq.s32.totalorder %s28, 1
      %p126 = por %p124, %p125
      %p127 = scmp.ne.s32.totalorder %s116, %s117
      %p128 = scmp.eq.s32.totalorder %s28, 0
      %p129 = por %p127, %p128
      %p130 = scmp.ne.s32.totalorder %s116, %s117
      %p131 = scmp.eq.s32.totalorder %s29, 1
      %p132 = por %p130, %p131
      %p134 = scmp.ne.s32.totalorder %s117, %s133
      %p135 = scmp.eq.s32.totalorder %s29, 0
      %p136 = por %p134, %p135
      %p137 = scmp.le.s32.totalorder 1, %s23
      %p138 = scmp.lt.s32.totalorder %s23, 3
      %p139 = pnand %p137, %p138
      %p140 = pneg %p139
      // Predicated region
      $region9: #{tpu_custom_call.1} parent=5 // pred_check
        _
      $region10: #{tpu_custom_call.1} parent=5 // pred_check_branch
        %142 = sbr.rel (%p139) target = $region12
      $region11: #{tpu_custom_call.1} parent=5 // pred_region
        %s143 = ssub.s32 %s23, 1
      $region12: #{tpu_custom_call.1} parent=5 // pred_fallthru
        _
      %p144 = scmp.lt.s32.totalorder %s23, 2
      // Predicated region
      $region13: #{tpu_custom_call.1} parent=5 // pred_check
        %p145 = pneg %p144
      $region14: #{tpu_custom_call.1} parent=5 // pred_check_branch
        %147 = sbr.rel (%p145) target = $region16
      $region15: #{tpu_custom_call.1} parent=5 // pred_region
        // Predicated region
        $region17: #{tpu_custom_call.1} parent=15 // pred_check
          %p148 = pneg %p43
        $region18: #{tpu_custom_call.1} parent=15 // pred_check_branch
          %150 = sbr.rel (%p148) target = $region20
        $region19: #{tpu_custom_call.1} parent=15 // pred_region
          %s151 = sand.u32 %s33, 1
          %s152 = scalar_lea.sflag [#allocation6], %s151
          %s153 = sand.u32 %s33, 1
          %s154 = smul.addr %s153, 32
          %s155 = scalar_lea.vmem [#allocation5], %s154
          %s157 = ssub.s32 512, 512
          %158 = vsyncadd %s152, %s157
          %s159 = smul.addr %s23, 4
          %s160 = smul.addr %s159, 128
          %s161 = scalar_lea.hbm %s1, %s160
          %s162 = sshll.u32 %s155, 4
          %s163 = int_to_ptr.vmem [resolvable:$true] %s162
          %168 = dma.hbm_to_vmem [thread:$0]  %s161, 512, %s163, %s152, 128, 128, 8
        $region20: #{tpu_custom_call.1} parent=15 // pred_fallthru
          _
        // Predicated region
        $region21: #{tpu_custom_call.1} parent=15 // pred_check
          %p169 = pneg %p71
        $region22: #{tpu_custom_call.1} parent=15 // pred_check_branch
          %171 = sbr.rel (%p169) target = $region24
        $region23: #{tpu_custom_call.1} parent=15 // pred_region
          %s172 = sand.u32 %s23, 1
          %s173 = scalar_lea.sflag [#allocation9], %s172
          %s174 = sand.u32 %s61, 1
          %s175 = smul.addr %s174, 32
          %s176 = scalar_lea.vmem [#allocation8], %s175
          %s177 = sadd.s32 %s23, 2
          %s179 = ssub.s32 512, 512
          %180 = vsyncadd %s173, %s179
          %s181 = smul.addr %s177, 4
          %s182 = smul.addr %s181, 128
          %s183 = scalar_lea.hbm %s2, %s182
          %s184 = sshll.u32 %s176, 4
          %s185 = int_to_ptr.vmem [resolvable:$true] %s184
          %190 = dma.hbm_to_vmem [thread:$0]  %s183, 512, %s185, %s173, 128, 128, 8
        $region24: #{tpu_custom_call.1} parent=15 // pred_fallthru
          _
        // Predicated region
        $region25: #{tpu_custom_call.1} parent=15 // pred_check
          %p191 = pneg %p97
        $region26: #{tpu_custom_call.1} parent=15 // pred_check_branch
          %193 = sbr.rel (%p191) target = $region28
        $region27: #{tpu_custom_call.1} parent=15 // pred_region
          %s194 = sand.u32 %s23, 1
          %s195 = scalar_lea.sflag [#allocation9], %s194
          %s196 = sand.u32 %s87, 1
          %s197 = smul.addr %s196, 8
          %s198 = scalar_lea.vmem [#allocation10], %s197
          %s200 = ssub.s32 128, 128
          %201 = vsyncadd %s195, %s200
          %s202 = smul.addr %s23, 4
          %s203 = smul.addr %s202, 32
          %s204 = scalar_lea.hbm %s3, %s203
          %s205 = sshll.u32 %s198, 4
          %s206 = int_to_ptr.vmem [resolvable:$true] %s205
          %211 = dma.hbm_to_vmem [thread:$0]  %s204, 128, %s206, %s195, 32, 32, 2
        $region28: #{tpu_custom_call.1} parent=15 // pred_fallthru
          _
      $region16: #{tpu_custom_call.1} parent=5 // pred_fallthru
        _
      %p212 = scmp.le.s32.totalorder 1, %s23
      %p213 = scmp.lt.s32.totalorder %s23, 3
      %p214 = pnand %p212, %p213
      %p215 = pneg %p214
      // Predicated region
      $region29: #{tpu_custom_call.1} parent=5 // pred_check
        _
      $region30: #{tpu_custom_call.1} parent=5 // pred_check_branch
        %217 = sbr.rel (%p214) target = $region32
      $region31: #{tpu_custom_call.1} parent=5 // pred_region
        %s218 = ssub.s32 %s23, 1
        %s219 = sand.u32 %s36, 1
        %s220 = scalar_lea.sflag [#allocation6], %s219
        %s221 = sand.u32 %s36, 1
        %s222 = smul.addr %s221, 32
        %s223 = scalar_lea.vmem [#allocation5], %s222
        // Predicated region
        $region33: #{tpu_custom_call.1} parent=31 // pred_check
          %p224 = pneg %p49
        $region34: #{tpu_custom_call.1} parent=31 // pred_check_branch
          %226 = sbr.rel (%p224) target = $region36
        $region35: #{tpu_custom_call.1} parent=31 // pred_region
          %227 = dma.done %s220, 512
        $region36: #{tpu_custom_call.1} parent=31 // pred_fallthru
          _
        %s228 = sand.u32 %s28, 1
        %s229 = scalar_lea.sflag [#allocation9], %s228
        %s230 = sand.u32 %s64, 1
        %s231 = smul.addr %s230, 32
        %s232 = scalar_lea.vmem [#allocation8], %s231
        // Predicated region
        $region37: #{tpu_custom_call.1} parent=31 // pred_check
          %p233 = pneg %p77
        $region38: #{tpu_custom_call.1} parent=31 // pred_check_branch
          %235 = sbr.rel (%p233) target = $region40
        $region39: #{tpu_custom_call.1} parent=31 // pred_region
          %236 = dma.done %s229, 512
        $region40: #{tpu_custom_call.1} parent=31 // pred_fallthru
          _
        %s237 = sand.u32 %s28, 1
        %s238 = scalar_lea.sflag [#allocation9], %s237
        %s239 = sand.u32 %s90, 1
        %s240 = smul.addr %s239, 8
        %s241 = scalar_lea.vmem [#allocation10], %s240
        // Predicated region
        $region41: #{tpu_custom_call.1} parent=31 // pred_check
          %p242 = pneg %p103
        $region42: #{tpu_custom_call.1} parent=31 // pred_check_branch
          %244 = sbr.rel (%p242) target = $region44
        $region43: #{tpu_custom_call.1} parent=31 // pred_region
          %245 = dma.done %s238, 128
        $region44: #{tpu_custom_call.1} parent=31 // pred_fallthru
          _
        %s246 = sand.u32 %s36, 1
        %s247 = scalar_lea.sflag [#allocation6], %s246
        %s248 = sand.u32 %s36, 1
        %s249 = smul.addr %s248, 32
        %s250 = scalar_lea.vmem [#allocation5], %s249
        %p251 = pneg %p49
        %p252 = pneg %p46
        %s253 = sand.u32 %s28, 1
        %s254 = scalar_lea.sflag [#allocation9], %s253
        %s255 = sand.u32 %s64, 1
        %s256 = smul.addr %s255, 32
        %s257 = scalar_lea.vmem [#allocation8], %s256
        %p258 = pneg %p77
        %p259 = pneg %p74
        %s260 = sand.u32 %s28, 1
        %s261 = scalar_lea.sflag [#allocation9], %s260
        %s262 = sand.u32 %s90, 1
        %s263 = smul.addr %s262, 8
        %s264 = scalar_lea.vmem [#allocation10], %s263
        %p265 = pneg %p103
        %p266 = pneg %p100
        %p267 = pneg %p129
        %p268 = pneg %p126
        %s269 = sand.u32 %s116, 1
        %s270 = scalar_lea.sflag [#allocation7], %s269
        %s271 = sand.u32 %s116, 1
        %s272 = smul.addr %s271, 8
        %s273 = scalar_lea.vmem [#allocation11], %s272
        %s274 = sadd.s32 %s28, 2
        %s275 = smul.u32 %s28, 128
        %s276 = sld [smem:[#allocation4 + %s275]]
        %s277 = sadd.s32 %s275, 1
        %s278 = sld [smem:[#allocation4 + %s277]]
        %p279 = scmp.lt.s32.totalorder %s276, 0
        %s280 = ssub.s32 0, %s276
        %s281 = scalar_select %p279, %s280, %s276
        %s282 = sand.u32 %s281, 15
        %s283 = ssub.s32 0, %s282
        %s284 = scalar_select %p279, %s283, %s282
        %p285 = scmp.ne.s32.totalorder %s284, 0
        %p286 = scmp.lt.s32.totalorder %s284, 0
        %p287 = pnand %p286, %p285
        %p288 = pneg %p287
        %s289 = sadd.s32 %s284, 16
        %s290 = scalar_select %p288, %s289, %s284
        %p291 = scmp.lt.s32.totalorder %s278, 0
        %s292 = ssub.s32 0, %s278
        %s293 = scalar_select %p291, %s292, %s278
        %s294 = sand.u32 %s293, 127
        %s295 = ssub.s32 0, %s294
        %s296 = scalar_select %p291, %s295, %s294
        %p297 = scmp.ne.s32.totalorder %s296, 0
        %p298 = scmp.lt.s32.totalorder %s296, 0
        %p299 = pnand %p298, %p297
        %p300 = pneg %p299
        %s301 = sadd.s32 %s296, 128
        %s302 = scalar_select %p300, %s301, %s296
        %s303 = ssub.s32 16, %s290
        %v304 = vlaneseq
        %v305 = vshrl.u32 %v304, 7
        %v306 = vadd.s32 %v305, 8
        %v307 = vlaneseq
        %v308 = vand.u32 %v307, 127
        %v309 = vstv %s276
        %v310 = vsub.s32 %v305, %v309
        %v311 = vsub.s32 %v306, %v309
        %v312 = vstv %s278
        %v313 = vsub.s32 %v308, %v312
        %vm314 = vcmp.ge.s32.totalorder %v310, 0
        %vm315 = vcmp.ge.s32.totalorder %v311, 0
        %vm316 = vcmp.lt.s32.totalorder %v310, 16
        %vm317 = vcmp.lt.s32.totalorder %v311, 16
        %vm318 = vmand %vm314, %vm316
        %vm319 = vmand %vm315, %vm317
        %vm320 = vcmp.ge.s32.totalorder %v313, 0
        %vm321 = vmand %vm318, %vm320
        %vm322 = vmand %vm319, %vm320
        %vm323 = vcmp.lt.s32.totalorder %v313, 128
        %vm324 = vmand %vm321, %vm323
        %vm325 = vmand %vm322, %vm323
        %v326 = vsel %vm324, 1, 0
        %v327 = vsel %vm325, 1, 0
        %v328 = vcvt.s32.f32 %v326
        %v329 = vcvt.s32.f32 %v327
        %v330 = vld [vmem:[%s223] sm:$0xff]
        %v331 = vld [vmem:[%s223 + $0x8] sm:$0xff]
        %v332 = vld [vmem:[%s232] sm:$0xff]
        %v333 = vld [vmem:[%s232 + $0x8] sm:$0xff]
        %v334 = vld [vmem:[%s241] sm:$0x3]
        %v335 = vld [vmem:[%s241 + $0x2] sm:$0x3]
        %v336 = vunpack.c.0.s8 %v334
        %v337 = vunpack.c.0.s8 %v335
        %v338 = vcvt.s32.f32 %v336
        %v339 = vcvt.s32.f32 %v337
        %340 = vst [vmem:[#allocation2] sm:$0xff] %v332
        %341 = vst [vmem:[#allocation2 + $0x8] sm:$0xff] %v333
        %342 = vst [vmem:[#allocation2 + $0x10] sm:$0xff] %v332
        %343 = vst [vmem:[#allocation2 + $0x18] sm:$0xff] %v333
        %s344 = scalar_lea.vmem [#allocation2], %s303
        %v345 = vld [vmem:[%s344] sm:$0xff]
        %v346 = vld [vmem:[%s344 + $0x8] sm:$0xff]
        %s347 = sand.u32 %s302, 127
        %s348 = sand.u32 %s347, 127
        %349 = vrot.lane.b32.xlu0 %v345, %s348
        %v350 = vpop.permute.xlu0 %349
        %351 = vrot.lane.b32.xlu0 %v346, %s348
        %v352 = vpop.permute.xlu0 %351
        %v353 = vmul.f32 %v338, %v328
        %v354 = vmul.f32 %v339, %v329
        %v355 = vsub.f32 %v330, %v350
        %v356 = vsub.f32 %v331, %v352
        %v357 = vmul.f32 %v353, %v355
        %v358 = vmul.f32 %v354, %v356
        %v359 = vmul.f32 %v357, %v355
        %v360 = vmul.f32 %v358, %v356
        %v361 = vadd.f32 %v359, 0.0
        %v362 = vadd.f32 %v360, 0.0
        %v363 = vadd.f32 %v353, 0.0
        %v364 = vadd.f32 %v354, 0.0
        %s365 = scalar_lea.vmem %s223, 16 [#allocation5]
        %v366 = vld [vmem:[%s365] sm:$0xff]
        %v367 = vld [vmem:[%s365 + $0x8] sm:$0xff]
        %s368 = scalar_lea.vmem %s232, 16 [#allocation8]
        %v369 = vld [vmem:[%s368] sm:$0xff]
        %v370 = vld [vmem:[%s368 + $0x8] sm:$0xff]
        %s371 = scalar_lea.vmem %s241, 4 [#allocation10]
        %v372 = vld [vmem:[%s371] sm:$0x3]
        %v373 = vld [vmem:[%s371 + $0x2] sm:$0x3]
        %v374 = vunpack.c.0.s8 %v372
        %v375 = vunpack.c.0.s8 %v373
        %v376 = vcvt.s32.f32 %v374
        %v377 = vcvt.s32.f32 %v375
        %378 = vst [vmem:[#allocation2] sm:$0xff] %v369
        %379 = vst [vmem:[#allocation2 + $0x8] sm:$0xff] %v370
        %380 = vst [vmem:[#allocation2 + $0x10] sm:$0xff] %v369
        %381 = vst [vmem:[#allocation2 + $0x18] sm:$0xff] %v370
        %v382 = vld [vmem:[%s344] sm:$0xff]
        %v383 = vld [vmem:[%s344 + $0x8] sm:$0xff]
        %384 = vrot.lane.b32.xlu0 %v382, %s348
        %v385 = vpop.permute.xlu0 %384
        %386 = vrot.lane.b32.xlu0 %v383, %s348
        %v387 = vpop.permute.xlu0 %386
        %v388 = vmul.f32 %v376, %v328
        %v389 = vmul.f32 %v377, %v329
        %v390 = vsub.f32 %v366, %v385
        %v391 = vsub.f32 %v367, %v387
        %v392 = vmul.f32 %v388, %v390
        %v393 = vmul.f32 %v389, %v391
        %v394 = vmul.f32 %v392, %v390
        %v395 = vmul.f32 %v393, %v391
        %v396 = vadd.f32 %v361, %v394
        %v397 = vadd.f32 %v362, %v395
        %v398 = vadd.f32 %v363, %v388
        %v399 = vadd.f32 %v364, %v389
        %v400 = vadd.f32 %v396, %v397
        %401 = vadd.xlane.f32.xlu0 %v400
        %v402 = vpop.xlane.xlu0 %401
        %v403 = vrot.slane %v402, 4
        %v404 = vadd.f32 %v402, %v403
        %v405 = vrot.slane %v404, 2
        %v406 = vadd.f32 %v404, %v405
        %v407 = vrot.slane %v406, 1
        %v408 = vadd.f32 %v406, %v407
        %s409 = vtos %v408
        %v410 = vadd.f32 %v398, %v399
        %411 = vadd.xlane.f32.xlu0 %v410
        %v412 = vpop.xlane.xlu0 %411
        %v413 = vrot.slane %v412, 4
        %v414 = vadd.f32 %v412, %v413
        %v415 = vrot.slane %v414, 2
        %v416 = vadd.f32 %v414, %v415
        %v417 = vrot.slane %v416, 1
        %v418 = vadd.f32 %v416, %v417
        %s419 = vtos %v418
        %vm420 = vcmp.eq.s32.totalorder %v305, 0
        %vm421 = vcmp.eq.s32.totalorder %v305, 1
        %v422 = vstv %s419
        %v423 = vsel %vm421, %v422, 0.0
        %v424 = vstv %s409
        %v425 = vsel %vm420, %v424, %v423
        %426 = vst [vmem:[%s273] sm:$0xff] %v425
        %s427 = sand.u32 %s116, 1
        %s428 = scalar_lea.sflag [#allocation7], %s427
        %s429 = sand.u32 %s116, 1
        %s430 = smul.addr %s429, 8
        %s431 = scalar_lea.vmem [#allocation11], %s430
        // Predicated region
        $region45: #{tpu_custom_call.1} parent=31 // pred_check
          %p432 = pneg %p126
        $region46: #{tpu_custom_call.1} parent=31 // pred_check_branch
          %434 = sbr.rel (%p432) target = $region48
        $region47: #{tpu_custom_call.1} parent=31 // pred_region
          %s436 = ssub.s32 128, 128
          %437 = vsyncadd %s428, %s436
          %s438 = smul.addr %s28, 128
          %s439 = scalar_lea.hbm %s4, %s438
          %s441 = sshll.u32 %s431, 4
          %s442 = int_to_ptr.vmem [resolvable:$true] %s441
          %444 = dma.vmem_to_hbm [thread:$0]  %s442, 128, %s439, %s428
        $region48: #{tpu_custom_call.1} parent=31 // pred_fallthru
          _
      $region32: #{tpu_custom_call.1} parent=5 // pred_fallthru
        _
      %p445 = scmp.le.s32.totalorder 2, %s23
      // Predicated region
      $region49: #{tpu_custom_call.1} parent=5 // pred_check
        %p446 = pneg %p445
      $region50: #{tpu_custom_call.1} parent=5 // pred_check_branch
        %448 = sbr.rel (%p446) target = $region52
      $region51: #{tpu_custom_call.1} parent=5 // pred_region
        %s449 = ssub.s32 %s23, 2
        // Predicated region
        $region53: #{tpu_custom_call.1} parent=51 // pred_check
          %p450 = pneg %p132
        $region54: #{tpu_custom_call.1} parent=51 // pred_check_branch
          %452 = sbr.rel (%p450) target = $region56
        $region55: #{tpu_custom_call.1} parent=51 // pred_region
          %s453 = sand.u32 %s117, 1
          %s454 = scalar_lea.sflag [#allocation7], %s453
          %s455 = sand.u32 %s117, 1
          %s456 = smul.addr %s455, 8
          %s457 = scalar_lea.vmem [#allocation11], %s456
          %458 = dma.done %s454, 128
        $region56: #{tpu_custom_call.1} parent=51 // pred_fallthru
          _
      $region52: #{tpu_custom_call.1} parent=5 // pred_fallthru
        _
    $region6: #{tpu_custom_call.1} parent=1 // loop_footer
      %s27 = sadd.s32 1, %s23
    $region7: #{tpu_custom_call.1} parent=1 // loop_footer_branch
      %22 = sbr.rel target = $region3
    $region8: #{tpu_custom_call.1} parent=1 // loop_exit
      _
    %459 = vsyncpa [#allocation6], 1
    %s460 = scalar_lea.sflag [#allocation6], 1
    %461 = vsyncpa %s460, 1
    %462 = vsyncpa [#allocation9], 1
    %s463 = scalar_lea.sflag [#allocation9], 1
    %464 = vsyncpa %s463, 1
    %465 = vsyncpa [#allocation7], 1
    %s466 = scalar_lea.sflag [#allocation7], 1
    %467 = vsyncpa %s466, 1

</llo_original>
